<compile_context>
chip_gen: v7x
topology: tpu7x:2x2x1
jax: 0.10.0
libtpu: 0.0.40
codegen_flags: <defaults>
</compile_context>

<pallas_src>
import math

import jax
import jax.numpy as jnp
from jax.experimental import pallas as pl
from jax.experimental.pallas import tpu as pltpu

EPS = 1e-5  # torch.nn.LayerNorm default


def _round_up(x, m):
    return ((x + m - 1) // m) * m


def _vmem_capacity_bytes():
    try:
        return int(pltpu.get_tpu_info().vmem_capacity_bytes)
    except Exception:
        return 64 << 20  # conservative default: v7x per-TensorCore VMEM


def _make_addnorm_kernel(h_valid, h_padded):
    """Builds the kernel: LayerNorm(x + y) over the last axis (valid width h_valid)."""
    need_mask = h_valid != h_padded
    inv_h = 1.0 / float(h_valid)

    def kernel(x_ref, y_ref, g_ref, b_ref, o_ref):
        # dropout(p=0) is identity -> residual add, then layer norm (f32 math).
        # TODO(synk): dropout with p>0 (training mode) would need
        # pltpu.prng_seed / pltpu.prng_random_bits masking; module default is p=0.
        z = x_ref[...].astype(jnp.float32) + y_ref[...].astype(jnp.float32)
        g = g_ref[...].astype(jnp.float32)
        b = b_ref[...].astype(jnp.float32)
        if need_mask:
            # Hidden dim was padded to a multiple of 128; exclude padded lanes
            # from the statistics (padded inputs are zero, but mask keeps the
            # variance exact).
            lane = jax.lax.broadcasted_iota(jnp.int32, z.shape, 1)
            mask = (lane < h_valid).astype(jnp.float32)
            z = z * mask
            mean = jnp.sum(z, axis=-1, keepdims=True) * inv_h
            centered = (z - mean) * mask
            var = jnp.sum(centered * centered, axis=-1, keepdims=True) * inv_h
        else:
            mean = jnp.mean(z, axis=-1, keepdims=True)
            centered = z - mean
            var = jnp.mean(centered * centered, axis=-1, keepdims=True)
        inv = jax.lax.rsqrt(var + EPS)
        o_ref[...] = (centered * inv * g + b).astype(o_ref.dtype)

    return kernel


def _pick_row_tile(R, Hp, itemsize, vmem_cap):
    # Sublane packing: 8 rows for 4-byte dtypes, 16 for 2-byte, 32 for 1-byte.
    sub = 8 * max(1, 4 // itemsize)
    # Per-row VMEM footprint: x, y, out blocks (double-buffered, input dtype)
    # plus f32 temporaries inside the kernel body.
    per_row = Hp * (2 * 3 * itemsize + 4 * 4)
    budget = min(vmem_cap, 128 << 20) // 2  # use at most ~half of VMEM for blocks
    rt = max(sub, budget // per_row)
    rt = min(rt, 1024)                      # measured returns flatten past ~1024 rows
    rt = min(rt, _round_up(R, sub))         # no point exceeding the (padded) problem
    if R >= 4 * sub:
        # Keep >= ~4 grid steps so the parallel axis can be sharded across cores.
        rt = min(rt, max(sub, _round_up(-(-R // 4), sub)))
    rt = max(sub, (rt // sub) * sub)
    return rt, sub


def add_norm(x, y, gamma, beta, *, row_tile=None):
    """LayerNorm(x + y) over the last axis. x, y: (..., H); gamma, beta: (H,)."""
    orig_shape = x.shape
    assert y.shape == orig_shape
    H = orig_shape[-1]
    R = int(math.prod(orig_shape[:-1])) if len(orig_shape) > 1 else 1
    x2 = x.reshape(R, H)
    y2 = y.reshape(R, H)

    itemsize = jnp.dtype(x.dtype).itemsize
    vmem_cap = _vmem_capacity_bytes()

    # Lane-dense last dim: pad H to a multiple of 128 (avoids masked vst.msk stores).
    Hp = _round_up(H, 128)

    if row_tile is None:
        row_tile, _ = _pick_row_tile(R, Hp, itemsize, vmem_cap)
    else:
        sub = 8 * max(1, 4 // itemsize)
        row_tile = max(sub, _round_up(row_tile, sub))

    # Pad rows so every grid step gets a full tile (no divisibility requirement).
    Rp = _round_up(R, row_tile)
    if Hp != H or Rp != R:
        x2 = jnp.pad(x2, ((0, Rp - R), (0, Hp - H)))
        y2 = jnp.pad(y2, ((0, Rp - R), (0, Hp - H)))
    gamma2 = jnp.pad(gamma.reshape(1, H), ((0, 0), (0, Hp - H)))
    beta2 = jnp.pad(beta.reshape(1, H), ((0, 0), (0, Hp - H)))

    # VMEM limit sized to the double-buffered working set (+ headroom),
    # capped below the physical per-core VMEM.
    est = 2 * 3 * row_tile * Hp * itemsize + 4 * row_tile * Hp * 4 + 4 * Hp * 4
    vmem_limit = int(min((vmem_cap * 3) // 4, max(est + (8 << 20), 32 << 20)))

    grid = (Rp // row_tile,)
    out = pl.pallas_call(
        _make_addnorm_kernel(H, Hp),
        out_shape=jax.ShapeDtypeStruct((Rp, Hp), x.dtype),
        grid_spec=pltpu.PrefetchScalarGridSpec(
            num_scalar_prefetch=0,
            grid=grid,
            in_specs=[
                pl.BlockSpec((row_tile, Hp), lambda i: (i, 0)),
                pl.BlockSpec((row_tile, Hp), lambda i: (i, 0)),
                pl.BlockSpec((1, Hp), lambda i: (0, 0)),
                pl.BlockSpec((1, Hp), lambda i: (0, 0)),
            ],
            out_specs=pl.BlockSpec((row_tile, Hp), lambda i: (i, 0)),
        ),
        compiler_params=pltpu.CompilerParams(
            dimension_semantics=("parallel",),
            vmem_limit_bytes=vmem_limit,
        ),
    )(x2, y2, gamma2, beta2)

    return out[:R, :H].reshape(orig_shape)


def _reference(X, Y, gamma, beta):
    z = X + Y
    mean = jnp.mean(z, axis=-1, keepdims=True)
    var = jnp.mean((z - mean) ** 2, axis=-1, keepdims=True)
    return (z - mean) / jnp.sqrt(var + EPS) * gamma + beta


if __name__ == "__main__":
    key = jax.random.PRNGKey(0)

    # Small demo shapes consistent with the module's forward: (batch, seq, hidden).
    batch, seq, hidden = 2, 8, 32
    kx, ky = jax.random.split(key)
    X = jax.random.normal(kx, (batch, seq, hidden), dtype=jnp.float32)
    Y = jax.random.normal(ky, (batch, seq, hidden), dtype=jnp.float32)

    # Deterministic LayerNorm params (PyTorch init: weight=1, bias=0).
    gamma = jnp.ones((hidden,), dtype=jnp.float32)
    beta = jnp.zeros((hidden,), dtype=jnp.float32)

    out = add_norm(X, Y, gamma, beta)
    jax.block_until_ready(out)
    ref = _reference(X, Y, gamma, beta)
    assert out.shape == ref.shape
    assert jnp.allclose(out, ref, atol=1e-5, rtol=1e-5), "mismatch vs reference"

    # Second check: awkward row count (exercises row-padding path).
    kx2, ky2 = jax.random.split(ky)
    X2 = jax.random.normal(kx2, (3, 5, hidden), dtype=jnp.float32)
    Y2 = jax.random.normal(ky2, (3, 5, hidden), dtype=jnp.float32)
    out2 = add_norm(X2, Y2, gamma, beta)
    jax.block_until_ready(out2)
    ref2 = _reference(X2, Y2, gamma, beta)
    assert jnp.allclose(out2, ref2, atol=1e-5, rtol=1e-5), "mismatch vs reference (ragged)"

    print("KERNEL_OK")
</pallas_src>

<mosaic_0001>
module attributes {stable_mosaic.version = 11 : i64} {
  func.func @kernel(%arg0: i32, %arg1: memref<16x128xf32, #tpu.memory_space<vmem>>, %arg2: memref<16x128xf32, #tpu.memory_space<vmem>>, %arg3: memref<1x128xf32, #tpu.memory_space<vmem>>, %arg4: memref<1x128xf32, #tpu.memory_space<vmem>>, %arg5: memref<16x128xf32, #tpu.memory_space<vmem>>) attributes {dimension_semantics = [#tpu.dimension_semantics<parallel>], iteration_bounds = array<i64: 1>, scalar_prefetch = 0 : i64, scratch_operands = 0 : i64, tpu.core_type = #tpu.core_type<tc>, window_params = [{transform_indices = @transform_0, window_bounds = array<i64: 16, 128>}, {transform_indices = @transform_1, window_bounds = array<i64: 16, 128>}, {pipeline_mode = #tpu.pipeline_mode<synchronous>, transform_indices = @transform_2, window_bounds = array<i64: 1, 128>}, {pipeline_mode = #tpu.pipeline_mode<synchronous>, transform_indices = @transform_3, window_bounds = array<i64: 1, 128>}, {transform_indices = @transform_4, window_bounds = array<i64: 16, 128>}]} {
    %c0 = arith.constant 0 : index
    %c0_0 = arith.constant 0 : index
    %0 = vector.load %arg1[%c0, %c0_0] : memref<16x128xf32, #tpu.memory_space<vmem>>, vector<16x128xf32>
    %c0_1 = arith.constant 0 : index
    %c0_2 = arith.constant 0 : index
    %1 = vector.load %arg2[%c0_1, %c0_2] : memref<16x128xf32, #tpu.memory_space<vmem>>, vector<16x128xf32>
    %2 = arith.addf %0, %1 : vector<16x128xf32>
    %c0_3 = arith.constant 0 : index
    %c0_4 = arith.constant 0 : index
    %3 = vector.load %arg3[%c0_3, %c0_4] : memref<1x128xf32, #tpu.memory_space<vmem>>, vector<1x128xf32>
    %c0_5 = arith.constant 0 : index
    %c0_6 = arith.constant 0 : index
    %4 = vector.load %arg4[%c0_5, %c0_6] : memref<1x128xf32, #tpu.memory_space<vmem>>, vector<1x128xf32>
    %5 = tpu.iota {dimensions = array<i32: 1>} : vector<16x128xi32>
    %c32_i32 = arith.constant 32 : i32
    %6 = vector.broadcast %c32_i32 : i32 to vector<16x128xi32>
    %7 = arith.cmpi slt, %5, %6 : vector<16x128xi32>
    %8 = arith.extui %7 : vector<16x128xi1> to vector<16x128xi32>
    %9 = arith.sitofp %8 : vector<16x128xi32> to vector<16x128xf32>
    %10 = arith.mulf %2, %9 : vector<16x128xf32>
    %cst = arith.constant dense<0.000000e+00> : vector<16xf32>
    %11 = vector.multi_reduction <add>, %10, %cst [1] : vector<16x128xf32> to vector<16xf32>
    %12 = vector.shape_cast %11 : vector<16xf32> to vector<16x1xf32>
    %cst_7 = arith.constant 3.125000e-02 : f32
    %13 = vector.broadcast %cst_7 : f32 to vector<16x1xf32>
    %14 = arith.mulf %12, %13 : vector<16x1xf32>
    %15 = vector.broadcast %14 : vector<16x1xf32> to vector<16x128xf32>
    %16 = arith.subf %10, %15 : vector<16x128xf32>
    %17 = arith.mulf %16, %9 : vector<16x128xf32>
    %18 = arith.mulf %17, %17 : vector<16x128xf32>
    %cst_8 = arith.constant dense<0.000000e+00> : vector<16xf32>
    %19 = vector.multi_reduction <add>, %18, %cst_8 [1] : vector<16x128xf32> to vector<16xf32>
    %20 = vector.shape_cast %19 : vector<16xf32> to vector<16x1xf32>
    %cst_9 = arith.constant 3.125000e-02 : f32
    %21 = vector.broadcast %cst_9 : f32 to vector<16x1xf32>
    %22 = arith.mulf %20, %21 : vector<16x1xf32>
    %cst_10 = arith.constant 9.99999974E-6 : f32
    %23 = vector.broadcast %cst_10 : f32 to vector<16x1xf32>
    %24 = arith.addf %22, %23 : vector<16x1xf32>
    %25 = math.rsqrt %24 : vector<16x1xf32>
    %26 = vector.broadcast %25 : vector<16x1xf32> to vector<16x128xf32>
    %27 = arith.mulf %17, %26 : vector<16x128xf32>
    %28 = vector.broadcast %3 : vector<1x128xf32> to vector<16x128xf32>
    %29 = arith.mulf %27, %28 : vector<16x128xf32>
    %30 = vector.broadcast %4 : vector<1x128xf32> to vector<16x128xf32>
    %31 = arith.addf %29, %30 : vector<16x128xf32>
    %c0_11 = arith.constant 0 : index
    %c0_12 = arith.constant 0 : index
    %32 = vector.load %arg5[%c0_11, %c0_12] : memref<16x128xf32, #tpu.memory_space<vmem>>, vector<16x128xf32>
    tpu.vector_store %arg5[%c0_11, %c0_12], %31 {strides = array<i32>} : memref<16x128xf32, #tpu.memory_space<vmem>>, vector<16x128xf32>,
    return
  }
  func.func @transform_0(%arg0: i32) -> (i32, i32) {
    %c0_i32 = arith.constant 0 : i32
    %c0_i32_0 = arith.constant 0 : i32
    return %arg0, %c0_i32 : i32, i32
  }
  func.func @transform_1(%arg0: i32) -> (i32, i32) {
    %c0_i32 = arith.constant 0 : i32
    %c0_i32_0 = arith.constant 0 : i32
    return %arg0, %c0_i32 : i32, i32
  }
  func.func @transform_2(%arg0: i32) -> (i32, i32) {
    %c0_i32 = arith.constant 0 : i32
    %c0_i32_0 = arith.constant 0 : i32
    %c0_i32_1 = arith.constant 0 : i32
    return %c0_i32, %c0_i32_0 : i32, i32
  }
  func.func @transform_3(%arg0: i32) -> (i32, i32) {
    %c0_i32 = arith.constant 0 : i32
    %c0_i32_0 = arith.constant 0 : i32
    %c0_i32_1 = arith.constant 0 : i32
    return %c0_i32, %c0_i32_0 : i32, i32
  }
  func.func @transform_4(%arg0: i32) -> (i32, i32) {
    %c0_i32 = arith.constant 0 : i32
    %c0_i32_0 = arith.constant 0 : i32
    return %arg0, %c0_i32 : i32, i32
  }
}

</mosaic_0001>

<llo_original>
// kernel: tpu_custom_call.1
$region0: #{tpu_custom_call.1}
  #allocation0 [shape = 'u32[]', space=smem, size = 0x4, offset = 0x4, fixed_abs, tag = 'smem constant byte address 0x4 - core index']
  #allocation1 [shape = 'u32[144,128]{1,0:T(1,128)}', space=vmem, size = 0x12000, scoped, tag = 'internal scratch']
  %s0 = inlined_call_operand.hbm [shape: f32[16,128], index: 0, kind: input, shape index: {}]
  %s1 = inlined_call_operand.hbm [shape: f32[16,128], index: 1, kind: input, shape index: {}]
  %s2 = inlined_call_operand.vmem [shape: f32[1,128], index: 2, kind: input, shape index: {}]
  %s3 = inlined_call_operand.vmem [shape: f32[1,128], index: 3, kind: input, shape index: {}]
  %s4 = inlined_call_operand.hbm [shape: f32[16,128], index: 4, kind: output, shape index: {}]
  %s5 = sld [smem:[#allocation0]]
  $region34: #{tpu_custom_call.1} parent=0
    _
  %s7 = ssub.s32 1, %s5
  %s8 = scalar_select 0, %s7, %s5
  $region1: #{tpu_custom_call.1} parent=0
    #allocation2 [shape = 'u8[8192]{0}', space=vmem, size = 0x2000, scoped, tag = 'input window, operand 0, single buffered']
    #allocation3 [shape = 's32[1]{0}', space=sflag, size = 0x4, scoped, tag = 'scoped memory for tpu_custom_call.1']
    #allocation4 [shape = 's32[1]{0}', space=sflag, size = 0x4, scoped, tag = 'scoped memory for tpu_custom_call.1']
    #allocation5 [shape = 'u8[8192]{0}', space=vmem, size = 0x2000, scoped, tag = 'input window, operand 1, single buffered']
    #allocation6 [shape = 's32[1]{0}', space=sflag, size = 0x4, scoped, tag = 'scoped memory for tpu_custom_call.1']
    #allocation7 [shape = 'u8[8192]{0}', space=vmem, size = 0x2000, scoped, tag = 'output window, operand 0, single buffered']
    %9 = vsyncpa [#allocation3], 0
    %10 = vsyncpa [#allocation6], 0
    %11 = vsyncpa [#allocation4], 0
    // Predicated region
    $region2: #{tpu_custom_call.1} parent=1 // pred_check
      _
    $region3: #{tpu_custom_call.1} parent=1 // pred_check_branch
      %13 = sbr.rel (0) target = $region5
    $region4: #{tpu_custom_call.1} parent=1 // pred_region
      %s15 = ssub.s32 256, 256
      %16 = vsyncadd [#allocation3], %s15
      %s17 = sshll.u32 [#allocation2], 4
      %s18 = int_to_ptr.vmem [resolvable:$true] %s17
      %23 = dma.hbm_to_vmem [thread:$0]  %s0, 256, %s18, [#allocation3], 128, 128, 8
    $region5: #{tpu_custom_call.1} parent=1 // pred_fallthru
      _
    // Predicated region
    $region6: #{tpu_custom_call.1} parent=1 // pred_check
      _
    $region7: #{tpu_custom_call.1} parent=1 // pred_check_branch
      %25 = sbr.rel (0) target = $region9
    $region8: #{tpu_custom_call.1} parent=1 // pred_region
      %s27 = ssub.s32 256, 256
      %28 = vsyncadd [#allocation6], %s27
      %s29 = sshll.u32 [#allocation5], 4
      %s30 = int_to_ptr.vmem [resolvable:$true] %s29
      %35 = dma.hbm_to_vmem [thread:$0]  %s1, 256, %s30, [#allocation6], 128, 128, 8
    $region9: #{tpu_custom_call.1} parent=1 // pred_fallthru
      _
    // Predicated region
    $region10: #{tpu_custom_call.1} parent=1 // pred_check
      _
    $region11: #{tpu_custom_call.1} parent=1 // pred_check_branch
      %37 = sbr.rel (0) target = $region13
    $region12: #{tpu_custom_call.1} parent=1 // pred_region
      _
    $region13: #{tpu_custom_call.1} parent=1 // pred_fallthru
      _
    // Predicated region
    $region14: #{tpu_custom_call.1} parent=1 // pred_check
      _
    $region15: #{tpu_custom_call.1} parent=1 // pred_check_branch
      %39 = sbr.rel (0) target = $region17
    $region16: #{tpu_custom_call.1} parent=1 // pred_region
      _
    $region17: #{tpu_custom_call.1} parent=1 // pred_fallthru
      _
    // Predicated region
    $region18: #{tpu_custom_call.1} parent=1 // pred_check
      _
    $region19: #{tpu_custom_call.1} parent=1 // pred_check_branch
      %41 = sbr.rel (0) target = $region21
    $region20: #{tpu_custom_call.1} parent=1 // pred_region
      %42 = dma.done [#allocation3], 256
    $region21: #{tpu_custom_call.1} parent=1 // pred_fallthru
      _
    // Predicated region
    $region22: #{tpu_custom_call.1} parent=1 // pred_check
      _
    $region23: #{tpu_custom_call.1} parent=1 // pred_check_branch
      %44 = sbr.rel (0) target = $region25
    $region24: #{tpu_custom_call.1} parent=1 // pred_region
      %45 = dma.done [#allocation6], 256
    $region25: #{tpu_custom_call.1} parent=1 // pred_fallthru
      _
    %v46 = vld [vmem:[#allocation2] sm:$0xff]
    %v47 = vld [vmem:[#allocation2 + $0x8] sm:$0xff]
    %v48 = vld [vmem:[#allocation5] sm:$0xff]
    %v49 = vld [vmem:[#allocation5 + $0x8] sm:$0xff]
    %v50 = vadd.f32 %v46, %v48
    %v51 = vadd.f32 %v47, %v49
    %v52 = vld [vmem:[%s2] sm:$0x1]
    %v53 = vld [vmem:[%s3] sm:$0x1]
    %v54 = vlaneseq
    %v55 = vand.u32 %v54, 127
    %vm56 = vcmp.lt.s32.totalorder %v55, 32
    %v57 = vsel %vm56, 1, 0
    %v58 = vcvt.s32.f32 %v57
    %v59 = vmul.f32 %v50, %v58
    %v60 = vmul.f32 %v51, %v58
    %61 = vadd.xlane.f32.xlu0 %v59
    %v62 = vpop.xlane.xlu0 %61
    %63 = vadd.xlane.f32.xlu0 %v60
    %v64 = vpop.xlane.xlu0 %63
    %v65 = vmul.f32 %v62, 0.03125
    %v66 = vmul.f32 %v64, 0.03125
    %v67 = vsub.f32 %v59, %v65
    %v68 = vsub.f32 %v60, %v66
    %v69 = vmul.f32 %v67, %v58
    %v70 = vmul.f32 %v68, %v58
    %v71 = vmul.f32 %v69, %v69
    %v72 = vmul.f32 %v70, %v70
    %73 = vadd.xlane.f32.xlu0 %v71
    %v74 = vpop.xlane.xlu0 %73
    %75 = vadd.xlane.f32.xlu0 %v72
    %v76 = vpop.xlane.xlu0 %75
    %v77 = vmul.f32 %v74, 0.03125
    %v78 = vmul.f32 %v76, 0.03125
    %v79 = vadd.f32 %v77, 1e-05
    %v80 = vadd.f32 %v78, 1e-05
    %v81 = vrsqrt.pop %v79
    %v82 = vrsqrt.pop %v80
    %v83 = vmul.f32 %v69, %v81
    %v84 = vmul.f32 %v70, %v82
    %v86 = vlaneseq
    %v87 = vshrl.u32 %v86, 7
    %v88 = vsub.s32 0, %v87
    %v89 = vrot.slane %v52, %v88
    %v91 = vmul.f32 %v83, %v89
    %v92 = vmul.f32 %v84, %v89
    %v94 = vlaneseq
    %v95 = vshrl.u32 %v94, 7
    %v96 = vsub.s32 0, %v95
    %v97 = vrot.slane %v53, %v96
    %v99 = vadd.f32 %v91, %v97
    %v100 = vadd.f32 %v92, %v97
    %101 = vst [vmem:[#allocation7] sm:$0xff] %v99
    %102 = vst [vmem:[#allocation7 + $0x8] sm:$0xff] %v100
    // Predicated region
    $region26: #{tpu_custom_call.1} parent=1 // pred_check
      _
    $region27: #{tpu_custom_call.1} parent=1 // pred_check_branch
      %104 = sbr.rel (0) target = $region29
    $region28: #{tpu_custom_call.1} parent=1 // pred_region
      %s106 = ssub.s32 256, 256
      %107 = vsyncadd [#allocation4], %s106
      %s108 = sshll.u32 [#allocation7], 4
      %s109 = int_to_ptr.vmem [resolvable:$true] %s108
      %114 = dma.vmem_to_hbm [thread:$0]  %s109, 256, %s4, [#allocation4], 128, 128, 8
    $region29: #{tpu_custom_call.1} parent=1 // pred_fallthru
      _
    // Predicated region
    $region30: #{tpu_custom_call.1} parent=1 // pred_check
      _
    $region31: #{tpu_custom_call.1} parent=1 // pred_check_branch
      %116 = sbr.rel (0) target = $region33
    $region32: #{tpu_custom_call.1} parent=1 // pred_region
      %117 = dma.done [#allocation4], 256
    $region33: #{tpu_custom_call.1} parent=1 // pred_fallthru
      _
    %118 = vsyncpa [#allocation3], 1
    %119 = vsyncpa [#allocation6], 1
    %120 = vsyncpa [#allocation4], 1

</llo_original>
